<compile_context>
chip_gen: v6e
topology: v6e:2x2x1
jax: 0.10.0
libtpu: 0.0.40
codegen_flags: <defaults>
</compile_context>

<pallas_src>
import jax
import jax.numpy as jnp
from jax import lax
from jax.experimental import pallas as pl
from jax.experimental.pallas import tpu as pltpu


def lstm_fc_kernel(x_ref, wih_ref, whh_ref, b_ref, wfc_ref, bfc_ref,
                   out_ref, gx_scr):
    """Full LSTM recurrence + final Linear, all VMEM-resident.

    x_ref:   (T*Bp, D)   time-major, batch-padded, flattened input
    wih_ref: (D, 4H)     input->gates weights (transposed)
    whh_ref: (4H, 4H)    hidden->gates weights (transposed), rows >= H are zero
    b_ref:   (1, 4H)     combined gate bias (b_ih + b_hh)
    wfc_ref: (4H, Cp)    final linear weights (transposed), rows >= H are zero
    bfc_ref: (1, Cp)     final linear bias (zero-padded)
    out_ref: (Bp, Cp)    padded logits (lane-dense store)
    gx_scr:  (T*Bp, 4H)  hoisted input-projection scratch
    """
    TB = x_ref.shape[0]
    G = whh_ref.shape[1]            # 4H
    H = G // 4
    Bp = out_ref.shape[0]
    T = TB // Bp

    # --- Hoisted, time-parallel input projection (single big MXU matmul). ---
    gx_scr[...] = (jnp.dot(x_ref[...], wih_ref[...],
                           preferred_element_type=jnp.float32)
                   + b_ref[...])

    whh = whh_ref[...]              # loop-invariant; loaded once
    # Lane mask selecting the g-gate lanes [2H, 3H) for tanh (others sigmoid).
    lane = lax.broadcasted_iota(jnp.int32, (Bp, G), 1)
    is_g = (lane >= 2 * H) & (lane < 3 * H)

    def step(t, carry):
        # h, c are "wide" (Bp, 4H); only lanes [0, H) are meaningful.
        h, c = carry
        start = pl.multiple_of(t * Bp, Bp)
        gx = gx_scr[pl.ds(start, Bp), :]                       # (Bp, 4H)
        gates = gx + jnp.dot(h, whh, preferred_element_type=jnp.float32)
        # Gate order matches PyTorch: lanes [i | f | g | o].
        act = jnp.where(is_g, jnp.tanh(gates), jax.nn.sigmoid(gates))
        f_al = pltpu.roll(act, 3 * H, 1)   # lanes [0,H) <- sigmoid(f)
        g_al = pltpu.roll(act, 2 * H, 1)   # lanes [0,H) <- tanh(g)
        o_al = pltpu.roll(act, 1 * H, 1)   # lanes [0,H) <- sigmoid(o)
        c_new = f_al * c + act * g_al      # lanes [0,H): f*c + i*g
        h_new = o_al * jnp.tanh(c_new)     # lanes [0,H): o*tanh(c_new)
        return h_new, c_new

    zeros = jnp.zeros((Bp, G), jnp.float32)
    h_fin, _ = lax.fori_loop(0, T, step, (zeros, zeros), unroll=True)

    # Final Linear: zero rows >= H in wfc kill the garbage lanes of h_fin.
    out_ref[...] = (jnp.dot(h_fin, wfc_ref[...],
                            preferred_element_type=jnp.float32)
                    + bfc_ref[...]).astype(out_ref.dtype)


@jax.jit
def recurrent_model_forward(x_btd, w_ih, w_hh, b_ih, b_hh, w_fc, b_fc):
    """x_btd: (B, T, D) batch_first like PyTorch. Returns logits (B, C)."""
    B, T, D = x_btd.shape
    H = w_hh.shape[1]
    G = 4 * H
    C = w_fc.shape[0]

    Bp = ((B + 7) // 8) * 8            # pad batch to sublane multiple
    Cp = ((C + 127) // 128) * 128      # pad classes to lane-dense output

    # --- Layout glue in plain XLA: padding / transposes / bias combine. ---
    x_p = jnp.pad(x_btd.astype(jnp.float32), ((0, Bp - B), (0, 0), (0, 0)))
    x_flat = jnp.transpose(x_p, (1, 0, 2)).reshape(T * Bp, D)   # (T*Bp, D) time-major

    w_ih_t = jnp.transpose(w_ih).astype(jnp.float32)            # (D, 4H)
    w_hh_wide = jnp.zeros((G, G), jnp.float32).at[:H, :].set(
        jnp.transpose(w_hh).astype(jnp.float32))                # (4H, 4H), rows>=H zero
    b = (b_ih + b_hh).astype(jnp.float32).reshape(1, G)         # (1, 4H)
    w_fc_wide = jnp.zeros((G, Cp), jnp.float32).at[:H, :C].set(
        jnp.transpose(w_fc).astype(jnp.float32))                # (4H, Cp), rows>=H zero
    b_fc_wide = jnp.zeros((1, Cp), jnp.float32).at[0, :C].set(
        b_fc.astype(jnp.float32))                               # (1, Cp)

    vmem_spec = pl.BlockSpec(memory_space=pltpu.MemorySpace.VMEM)

    out_padded = pl.pallas_call(
        lstm_fc_kernel,
        out_shape=jax.ShapeDtypeStruct((Bp, Cp), jnp.float32),
        in_specs=[vmem_spec] * 6,
        out_specs=vmem_spec,
        scratch_shapes=[
            pltpu.VMEM((T * Bp, G), jnp.float32),   # hoisted x-projection
        ],
    )(x_flat, w_ih_t, w_hh_wide, b, w_fc_wide, b_fc_wide)

    return out_padded[:B, :C]


def reference_forward(x_btd, w_ih, w_hh, b_ih, b_hh, w_fc, b_fc):
    """Pure-JAX reference matching PyTorch nn.LSTM (1 layer, unidirectional)."""
    B, T, D = x_btd.shape
    H = w_hh.shape[1]

    def cell(carry, xt):
        h, c = carry
        gates = xt @ w_ih.T + b_ih + h @ w_hh.T + b_hh
        i = jax.nn.sigmoid(gates[:, 0 * H:1 * H])
        f = jax.nn.sigmoid(gates[:, 1 * H:2 * H])
        g = jnp.tanh(gates[:, 2 * H:3 * H])
        o = jax.nn.sigmoid(gates[:, 3 * H:4 * H])
        c_new = f * c + i * g
        h_new = o * jnp.tanh(c_new)
        return (h_new, c_new), None

    h0 = jnp.zeros((B, H), jnp.float32)
    c0 = jnp.zeros((B, H), jnp.float32)
    (h_final, _), _ = lax.scan(cell, (h0, c0), jnp.transpose(x_btd, (1, 0, 2)))
    return h_final @ w_fc.T + b_fc


if __name__ == "__main__":
    # Small shapes consistent with the module's forward semantics.
    B, T, D, H, C = 2, 8, 64, 32, 2

    key = jax.random.PRNGKey(0)
    keys = jax.random.split(key, 7)
    scale = 1.0 / jnp.sqrt(H)

    x = jax.random.normal(keys[0], (B, T, D), jnp.float32)
    w_ih = jax.random.uniform(keys[1], (4 * H, D), jnp.float32, -scale, scale)
    w_hh = jax.random.uniform(keys[2], (4 * H, H), jnp.float32, -scale, scale)
    b_ih = jax.random.uniform(keys[3], (4 * H,), jnp.float32, -scale, scale)
    b_hh = jax.random.uniform(keys[4], (4 * H,), jnp.float32, -scale, scale)
    w_fc = jax.random.uniform(keys[5], (C, H), jnp.float32, -scale, scale)
    b_fc = jax.random.uniform(keys[6], (C,), jnp.float32, -scale, scale)

    logits = recurrent_model_forward(x, w_ih, w_hh, b_ih, b_hh, w_fc, b_fc)
    jax.block_until_ready(logits)

    ref = reference_forward(x, w_ih, w_hh, b_ih, b_hh, w_fc, b_fc)
    assert logits.shape == (B, C)
    assert jnp.allclose(logits, ref, atol=1e-4, rtol=1e-4), "mismatch vs reference"

    print("KERNEL_OK")
</pallas_src>

<mosaic_0001>
module attributes {stable_mosaic.version = 11 : i64} {
  func.func @lstm_fc_kernel(%arg0: memref<64x64xf32, #tpu.memory_space<vmem>>, %arg1: memref<64x128xf32, #tpu.memory_space<vmem>>, %arg2: memref<128x128xf32, #tpu.memory_space<vmem>>, %arg3: memref<1x128xf32, #tpu.memory_space<vmem>>, %arg4: memref<128x128xf32, #tpu.memory_space<vmem>>, %arg5: memref<1x128xf32, #tpu.memory_space<vmem>>, %arg6: memref<8x128xf32, #tpu.memory_space<vmem>>, %arg7: memref<64x128xf32, #tpu.memory_space<vmem>>) attributes {dimension_semantics = [], scalar_prefetch = 0 : i64, scratch_operands = 1 : i64, tpu.core_type = #tpu.core_type<tc>} {
    %c0 = arith.constant 0 : index
    %c0_0 = arith.constant 0 : index
    %0 = vector.load %arg0[%c0, %c0_0] : memref<64x64xf32, #tpu.memory_space<vmem>>, vector<64x64xf32>
    %c0_1 = arith.constant 0 : index
    %c0_2 = arith.constant 0 : index
    %1 = vector.load %arg1[%c0_1, %c0_2] : memref<64x128xf32, #tpu.memory_space<vmem>>, vector<64x128xf32>
    %cst = arith.constant dense<0.000000e+00> : vector<64x128xf32>
    %2 = tpu.matmul %0, %1, %cst {dimension_numbers = #tpu.dot_dimension_numbers<[1], [0], [0], [1], [0, 0, 1, 1], [], []>} : vector<64x64xf32>, vector<64x128xf32>, vector<64x128xf32> -> vector<64x128xf32>
    %c0_3 = arith.constant 0 : index
    %c0_4 = arith.constant 0 : index
    %3 = vector.load %arg3[%c0_3, %c0_4] : memref<1x128xf32, #tpu.memory_space<vmem>>, vector<1x128xf32>
    %4 = vector.broadcast %3 : vector<1x128xf32> to vector<64x128xf32>
    %5 = arith.addf %2, %4 : vector<64x128xf32>
    %c0_5 = arith.constant 0 : index
    %c0_6 = arith.constant 0 : index
    %6 = vector.load %arg7[%c0_5, %c0_6] : memref<64x128xf32, #tpu.memory_space<vmem>>, vector<64x128xf32>
    tpu.vector_store %arg7[%c0_5, %c0_6], %5 {strides = array<i32>} : memref<64x128xf32, #tpu.memory_space<vmem>>, vector<64x128xf32>,
    %c0_7 = arith.constant 0 : index
    %c0_8 = arith.constant 0 : index
    %7 = vector.load %arg2[%c0_7, %c0_8] : memref<128x128xf32, #tpu.memory_space<vmem>>, vector<128x128xf32>
    %8 = tpu.iota {dimensions = array<i32: 1>} : vector<8x128xi32>
    %c64_i32 = arith.constant 64 : i32
    %9 = vector.broadcast %c64_i32 : i32 to vector<8x128xi32>
    %10 = arith.cmpi sge, %8, %9 : vector<8x128xi32>
    %c96_i32 = arith.constant 96 : i32
    %11 = vector.broadcast %c96_i32 : i32 to vector<8x128xi32>
    %12 = arith.cmpi slt, %8, %11 : vector<8x128xi32>
    %13 = arith.andi %10, %12 : vector<8x128xi1>
    %cst_9 = arith.constant 0.000000e+00 : f32
    %14 = vector.broadcast %cst_9 : f32 to vector<8x128xf32>
    %c0_i32 = arith.constant 0 : i32
    %c8_i32 = arith.constant 8 : i32
    %15 = arith.muli %c0_i32, %c8_i32 : i32
    %16 = tpu.assume_multiple %15, 8 : i32
    %17 = arith.index_cast %16 : i32 to index
    %c0_10 = arith.constant 0 : index
    %18 = vector.load %arg7[%17, %c0_10] : memref<64x128xf32, #tpu.memory_space<vmem>>, vector<8x128xf32>
    %cst_11 = arith.constant dense<0.000000e+00> : vector<8x128xf32>
    %19 = tpu.matmul %14, %7, %cst_11 {dimension_numbers = #tpu.dot_dimension_numbers<[1], [0], [0], [1], [0, 0, 1, 1], [], []>} : vector<8x128xf32>, vector<128x128xf32>, vector<8x128xf32> -> vector<8x128xf32>
    %20 = arith.addf %18, %19 : vector<8x128xf32>
    %21 = math.tanh %20 : vector<8x128xf32>
    %22 = arith.negf %20 : vector<8x128xf32>
    %23 = math.exp %22 : vector<8x128xf32>
    %cst_12 = arith.constant 1.000000e+00 : f32
    %24 = vector.broadcast %cst_12 : f32 to vector<8x128xf32>
    %25 = arith.addf %24, %23 : vector<8x128xf32>
    %26 = arith.divf %24, %25 : vector<8x128xf32>
    %27 = arith.select %13, %21, %26 : vector<8x128xi1>, vector<8x128xf32>
    %c96_i32_13 = arith.constant 96 : i32
    %28 = tpu.dynamic_rotate %27 by %c96_i32_13 dim 1 : vector<8x128xf32>, i32 -> vector<8x128xf32>
    %c64_i32_14 = arith.constant 64 : i32
    %29 = tpu.dynamic_rotate %27 by %c64_i32_14 dim 1 : vector<8x128xf32>, i32 -> vector<8x128xf32>
    %c32_i32 = arith.constant 32 : i32
    %30 = tpu.dynamic_rotate %27 by %c32_i32 dim 1 : vector<8x128xf32>, i32 -> vector<8x128xf32>
    %31 = arith.mulf %28, %14 : vector<8x128xf32>
    %32 = arith.mulf %27, %29 : vector<8x128xf32>
    %33 = arith.addf %31, %32 : vector<8x128xf32>
    %34 = math.tanh %33 : vector<8x128xf32>
    %35 = arith.mulf %30, %34 : vector<8x128xf32>
    %c1_i32 = arith.constant 1 : i32
    %c8_i32_15 = arith.constant 8 : i32
    %36 = arith.muli %c1_i32, %c8_i32_15 : i32
    %37 = tpu.assume_multiple %36, 8 : i32
    %38 = arith.index_cast %37 : i32 to index
    %c0_16 = arith.constant 0 : index
    %39 = vector.load %arg7[%38, %c0_16] : memref<64x128xf32, #tpu.memory_space<vmem>>, vector<8x128xf32>
    %cst_17 = arith.constant dense<0.000000e+00> : vector<8x128xf32>
    %40 = tpu.matmul %35, %7, %cst_17 {dimension_numbers = #tpu.dot_dimension_numbers<[1], [0], [0], [1], [0, 0, 1, 1], [], []>} : vector<8x128xf32>, vector<128x128xf32>, vector<8x128xf32> -> vector<8x128xf32>
    %41 = arith.addf %39, %40 : vector<8x128xf32>
    %42 = math.tanh %41 : vector<8x128xf32>
    %43 = arith.negf %41 : vector<8x128xf32>
    %44 = math.exp %43 : vector<8x128xf32>
    %cst_18 = arith.constant 1.000000e+00 : f32
    %45 = vector.broadcast %cst_18 : f32 to vector<8x128xf32>
    %46 = arith.addf %45, %44 : vector<8x128xf32>
    %47 = arith.divf %45, %46 : vector<8x128xf32>
    %48 = arith.select %13, %42, %47 : vector<8x128xi1>, vector<8x128xf32>
    %c96_i32_19 = arith.constant 96 : i32
    %49 = tpu.dynamic_rotate %48 by %c96_i32_19 dim 1 : vector<8x128xf32>, i32 -> vector<8x128xf32>
    %c64_i32_20 = arith.constant 64 : i32
    %50 = tpu.dynamic_rotate %48 by %c64_i32_20 dim 1 : vector<8x128xf32>, i32 -> vector<8x128xf32>
    %c32_i32_21 = arith.constant 32 : i32
    %51 = tpu.dynamic_rotate %48 by %c32_i32_21 dim 1 : vector<8x128xf32>, i32 -> vector<8x128xf32>
    %52 = arith.mulf %49, %33 : vector<8x128xf32>
    %53 = arith.mulf %48, %50 : vector<8x128xf32>
    %54 = arith.addf %52, %53 : vector<8x128xf32>
    %55 = math.tanh %54 : vector<8x128xf32>
    %56 = arith.mulf %51, %55 : vector<8x128xf32>
    %c2_i32 = arith.constant 2 : i32
    %c8_i32_22 = arith.constant 8 : i32
    %57 = arith.muli %c2_i32, %c8_i32_22 : i32
    %58 = tpu.assume_multiple %57, 8 : i32
    %59 = arith.index_cast %58 : i32 to index
    %c0_23 = arith.constant 0 : index
    %60 = vector.load %arg7[%59, %c0_23] : memref<64x128xf32, #tpu.memory_space<vmem>>, vector<8x128xf32>
    %cst_24 = arith.constant dense<0.000000e+00> : vector<8x128xf32>
    %61 = tpu.matmul %56, %7, %cst_24 {dimension_numbers = #tpu.dot_dimension_numbers<[1], [0], [0], [1], [0, 0, 1, 1], [], []>} : vector<8x128xf32>, vector<128x128xf32>, vector<8x128xf32> -> vector<8x128xf32>
    %62 = arith.addf %60, %61 : vector<8x128xf32>
    %63 = math.tanh %62 : vector<8x128xf32>
    %64 = arith.negf %62 : vector<8x128xf32>
    %65 = math.exp %64 : vector<8x128xf32>
    %cst_25 = arith.constant 1.000000e+00 : f32
    %66 = vector.broadcast %cst_25 : f32 to vector<8x128xf32>
    %67 = arith.addf %66, %65 : vector<8x128xf32>
    %68 = arith.divf %66, %67 : vector<8x128xf32>
    %69 = arith.select %13, %63, %68 : vector<8x128xi1>, vector<8x128xf32>
    %c96_i32_26 = arith.constant 96 : i32
    %70 = tpu.dynamic_rotate %69 by %c96_i32_26 dim 1 : vector<8x128xf32>, i32 -> vector<8x128xf32>
    %c64_i32_27 = arith.constant 64 : i32
    %71 = tpu.dynamic_rotate %69 by %c64_i32_27 dim 1 : vector<8x128xf32>, i32 -> vector<8x128xf32>
    %c32_i32_28 = arith.constant 32 : i32
    %72 = tpu.dynamic_rotate %69 by %c32_i32_28 dim 1 : vector<8x128xf32>, i32 -> vector<8x128xf32>
    %73 = arith.mulf %70, %54 : vector<8x128xf32>
    %74 = arith.mulf %69, %71 : vector<8x128xf32>
    %75 = arith.addf %73, %74 : vector<8x128xf32>
    %76 = math.tanh %75 : vector<8x128xf32>
    %77 = arith.mulf %72, %76 : vector<8x128xf32>
    %c3_i32 = arith.constant 3 : i32
    %c8_i32_29 = arith.constant 8 : i32
    %78 = arith.muli %c3_i32, %c8_i32_29 : i32
    %79 = tpu.assume_multiple %78, 8 : i32
    %80 = arith.index_cast %79 : i32 to index
    %c0_30 = arith.constant 0 : index
    %81 = vector.load %arg7[%80, %c0_30] : memref<64x128xf32, #tpu.memory_space<vmem>>, vector<8x128xf32>
    %cst_31 = arith.constant dense<0.000000e+00> : vector<8x128xf32>
    %82 = tpu.matmul %77, %7, %cst_31 {dimension_numbers = #tpu.dot_dimension_numbers<[1], [0], [0], [1], [0, 0, 1, 1], [], []>} : vector<8x128xf32>, vector<128x128xf32>, vector<8x128xf32> -> vector<8x128xf32>
    %83 = arith.addf %81, %82 : vector<8x128xf32>
    %84 = math.tanh %83 : vector<8x128xf32>
    %85 = arith.negf %83 : vector<8x128xf32>
    %86 = math.exp %85 : vector<8x128xf32>
    %cst_32 = arith.constant 1.000000e+00 : f32
    %87 = vector.broadcast %cst_32 : f32 to vector<8x128xf32>
    %88 = arith.addf %87, %86 : vector<8x128xf32>
    %89 = arith.divf %87, %88 : vector<8x128xf32>
    %90 = arith.select %13, %84, %89 : vector<8x128xi1>, vector<8x128xf32>
    %c96_i32_33 = arith.constant 96 : i32
    %91 = tpu.dynamic_rotate %90 by %c96_i32_33 dim 1 : vector<8x128xf32>, i32 -> vector<8x128xf32>
    %c64_i32_34 = arith.constant 64 : i32
    %92 = tpu.dynamic_rotate %90 by %c64_i32_34 dim 1 : vector<8x128xf32>, i32 -> vector<8x128xf32>
    %c32_i32_35 = arith.constant 32 : i32
    %93 = tpu.dynamic_rotate %90 by %c32_i32_35 dim 1 : vector<8x128xf32>, i32 -> vector<8x128xf32>
    %94 = arith.mulf %91, %75 : vector<8x128xf32>
    %95 = arith.mulf %90, %92 : vector<8x128xf32>
    %96 = arith.addf %94, %95 : vector<8x128xf32>
    %97 = math.tanh %96 : vector<8x128xf32>
    %98 = arith.mulf %93, %97 : vector<8x128xf32>
    %c4_i32 = arith.constant 4 : i32
    %c8_i32_36 = arith.constant 8 : i32
    %99 = arith.muli %c4_i32, %c8_i32_36 : i32
    %100 = tpu.assume_multiple %99, 8 : i32
    %101 = arith.index_cast %100 : i32 to index
    %c0_37 = arith.constant 0 : index
    %102 = vector.load %arg7[%101, %c0_37] : memref<64x128xf32, #tpu.memory_space<vmem>>, vector<8x128xf32>
    %cst_38 = arith.constant dense<0.000000e+00> : vector<8x128xf32>
    %103 = tpu.matmul %98, %7, %cst_38 {dimension_numbers = #tpu.dot_dimension_numbers<[1], [0], [0], [1], [0, 0, 1, 1], [], []>} : vector<8x128xf32>, vector<128x128xf32>, vector<8x128xf32> -> vector<8x128xf32>
    %104 = arith.addf %102, %103 : vector<8x128xf32>
    %105 = math.tanh %104 : vector<8x128xf32>
    %106 = arith.negf %104 : vector<8x128xf32>
    %107 = math.exp %106 : vector<8x128xf32>
    %cst_39 = arith.constant 1.000000e+00 : f32
    %108 = vector.broadcast %cst_39 : f32 to vector<8x128xf32>
    %109 = arith.addf %108, %107 : vector<8x128xf32>
    %110 = arith.divf %108, %109 : vector<8x128xf32>
    %111 = arith.select %13, %105, %110 : vector<8x128xi1>, vector<8x128xf32>
    %c96_i32_40 = arith.constant 96 : i32
    %112 = tpu.dynamic_rotate %111 by %c96_i32_40 dim 1 : vector<8x128xf32>, i32 -> vector<8x128xf32>
    %c64_i32_41 = arith.constant 64 : i32
    %113 = tpu.dynamic_rotate %111 by %c64_i32_41 dim 1 : vector<8x128xf32>, i32 -> vector<8x128xf32>
    %c32_i32_42 = arith.constant 32 : i32
    %114 = tpu.dynamic_rotate %111 by %c32_i32_42 dim 1 : vector<8x128xf32>, i32 -> vector<8x128xf32>
    %115 = arith.mulf %112, %96 : vector<8x128xf32>
    %116 = arith.mulf %111, %113 : vector<8x128xf32>
    %117 = arith.addf %115, %116 : vector<8x128xf32>
    %118 = math.tanh %117 : vector<8x128xf32>
    %119 = arith.mulf %114, %118 : vector<8x128xf32>
    %c5_i32 = arith.constant 5 : i32
    %c8_i32_43 = arith.constant 8 : i32
    %120 = arith.muli %c5_i32, %c8_i32_43 : i32
    %121 = tpu.assume_multiple %120, 8 : i32
    %122 = arith.index_cast %121 : i32 to index
    %c0_44 = arith.constant 0 : index
    %123 = vector.load %arg7[%122, %c0_44] : memref<64x128xf32, #tpu.memory_space<vmem>>, vector<8x128xf32>
    %cst_45 = arith.constant dense<0.000000e+00> : vector<8x128xf32>
    %124 = tpu.matmul %119, %7, %cst_45 {dimension_numbers = #tpu.dot_dimension_numbers<[1], [0], [0], [1], [0, 0, 1, 1], [], []>} : vector<8x128xf32>, vector<128x128xf32>, vector<8x128xf32> -> vector<8x128xf32>
    %125 = arith.addf %123, %124 : vector<8x128xf32>
    %126 = math.tanh %125 : vector<8x128xf32>
    %127 = arith.negf %125 : vector<8x128xf32>
    %128 = math.exp %127 : vector<8x128xf32>
    %cst_46 = arith.constant 1.000000e+00 : f32
    %129 = vector.broadcast %cst_46 : f32 to vector<8x128xf32>
    %130 = arith.addf %129, %128 : vector<8x128xf32>
    %131 = arith.divf %129, %130 : vector<8x128xf32>
    %132 = arith.select %13, %126, %131 : vector<8x128xi1>, vector<8x128xf32>
    %c96_i32_47 = arith.constant 96 : i32
    %133 = tpu.dynamic_rotate %132 by %c96_i32_47 dim 1 : vector<8x128xf32>, i32 -> vector<8x128xf32>
    %c64_i32_48 = arith.constant 64 : i32
    %134 = tpu.dynamic_rotate %132 by %c64_i32_48 dim 1 : vector<8x128xf32>, i32 -> vector<8x128xf32>
    %c32_i32_49 = arith.constant 32 : i32
    %135 = tpu.dynamic_rotate %132 by %c32_i32_49 dim 1 : vector<8x128xf32>, i32 -> vector<8x128xf32>
    %136 = arith.mulf %133, %117 : vector<8x128xf32>
    %137 = arith.mulf %132, %134 : vector<8x128xf32>
    %138 = arith.addf %136, %137 : vector<8x128xf32>
    %139 = math.tanh %138 : vector<8x128xf32>
    %140 = arith.mulf %135, %139 : vector<8x128xf32>
    %c6_i32 = arith.constant 6 : i32
    %c8_i32_50 = arith.constant 8 : i32
    %141 = arith.muli %c6_i32, %c8_i32_50 : i32
    %142 = tpu.assume_multiple %141, 8 : i32
    %143 = arith.index_cast %142 : i32 to index
    %c0_51 = arith.constant 0 : index
    %144 = vector.load %arg7[%143, %c0_51] : memref<64x128xf32, #tpu.memory_space<vmem>>, vector<8x128xf32>
    %cst_52 = arith.constant dense<0.000000e+00> : vector<8x128xf32>
    %145 = tpu.matmul %140, %7, %cst_52 {dimension_numbers = #tpu.dot_dimension_numbers<[1], [0], [0], [1], [0, 0, 1, 1], [], []>} : vector<8x128xf32>, vector<128x128xf32>, vector<8x128xf32> -> vector<8x128xf32>
    %146 = arith.addf %144, %145 : vector<8x128xf32>
    %147 = math.tanh %146 : vector<8x128xf32>
    %148 = arith.negf %146 : vector<8x128xf32>
    %149 = math.exp %148 : vector<8x128xf32>
    %cst_53 = arith.constant 1.000000e+00 : f32
    %150 = vector.broadcast %cst_53 : f32 to vector<8x128xf32>
    %151 = arith.addf %150, %149 : vector<8x128xf32>
    %152 = arith.divf %150, %151 : vector<8x128xf32>
    %153 = arith.select %13, %147, %152 : vector<8x128xi1>, vector<8x128xf32>
    %c96_i32_54 = arith.constant 96 : i32
    %154 = tpu.dynamic_rotate %153 by %c96_i32_54 dim 1 : vector<8x128xf32>, i32 -> vector<8x128xf32>
    %c64_i32_55 = arith.constant 64 : i32
    %155 = tpu.dynamic_rotate %153 by %c64_i32_55 dim 1 : vector<8x128xf32>, i32 -> vector<8x128xf32>
    %c32_i32_56 = arith.constant 32 : i32
    %156 = tpu.dynamic_rotate %153 by %c32_i32_56 dim 1 : vector<8x128xf32>, i32 -> vector<8x128xf32>
    %157 = arith.mulf %154, %138 : vector<8x128xf32>
    %158 = arith.mulf %153, %155 : vector<8x128xf32>
    %159 = arith.addf %157, %158 : vector<8x128xf32>
    %160 = math.tanh %159 : vector<8x128xf32>
    %161 = arith.mulf %156, %160 : vector<8x128xf32>
    %c7_i32 = arith.constant 7 : i32
    %c8_i32_57 = arith.constant 8 : i32
    %162 = arith.muli %c7_i32, %c8_i32_57 : i32
    %163 = tpu.assume_multiple %162, 8 : i32
    %164 = arith.index_cast %163 : i32 to index
    %c0_58 = arith.constant 0 : index
    %165 = vector.load %arg7[%164, %c0_58] : memref<64x128xf32, #tpu.memory_space<vmem>>, vector<8x128xf32>
    %cst_59 = arith.constant dense<0.000000e+00> : vector<8x128xf32>
    %166 = tpu.matmul %161, %7, %cst_59 {dimension_numbers = #tpu.dot_dimension_numbers<[1], [0], [0], [1], [0, 0, 1, 1], [], []>} : vector<8x128xf32>, vector<128x128xf32>, vector<8x128xf32> -> vector<8x128xf32>
    %167 = arith.addf %165, %166 : vector<8x128xf32>
    %168 = math.tanh %167 : vector<8x128xf32>
    %169 = arith.negf %167 : vector<8x128xf32>
    %170 = math.exp %169 : vector<8x128xf32>
    %cst_60 = arith.constant 1.000000e+00 : f32
    %171 = vector.broadcast %cst_60 : f32 to vector<8x128xf32>
    %172 = arith.addf %171, %170 : vector<8x128xf32>
    %173 = arith.divf %171, %172 : vector<8x128xf32>
    %174 = arith.select %13, %168, %173 : vector<8x128xi1>, vector<8x128xf32>
    %c96_i32_61 = arith.constant 96 : i32
    %175 = tpu.dynamic_rotate %174 by %c96_i32_61 dim 1 : vector<8x128xf32>, i32 -> vector<8x128xf32>
    %c64_i32_62 = arith.constant 64 : i32
    %176 = tpu.dynamic_rotate %174 by %c64_i32_62 dim 1 : vector<8x128xf32>, i32 -> vector<8x128xf32>
    %c32_i32_63 = arith.constant 32 : i32
    %177 = tpu.dynamic_rotate %174 by %c32_i32_63 dim 1 : vector<8x128xf32>, i32 -> vector<8x128xf32>
    %178 = arith.mulf %175, %159 : vector<8x128xf32>
    %179 = arith.mulf %174, %176 : vector<8x128xf32>
    %180 = arith.addf %178, %179 : vector<8x128xf32>
    %181 = math.tanh %180 : vector<8x128xf32>
    %182 = arith.mulf %177, %181 : vector<8x128xf32>
    %c8_i32_64 = arith.constant 8 : i32
    %c0_65 = arith.constant 0 : index
    %c0_66 = arith.constant 0 : index
    %183 = vector.load %arg4[%c0_65, %c0_66] : memref<128x128xf32, #tpu.memory_space<vmem>>, vector<128x128xf32>
    %cst_67 = arith.constant dense<0.000000e+00> : vector<8x128xf32>
    %184 = tpu.matmul %182, %183, %cst_67 {dimension_numbers = #tpu.dot_dimension_numbers<[1], [0], [0], [1], [0, 0, 1, 1], [], []>} : vector<8x128xf32>, vector<128x128xf32>, vector<8x128xf32> -> vector<8x128xf32>
    %c0_68 = arith.constant 0 : index
    %c0_69 = arith.constant 0 : index
    %185 = vector.load %arg5[%c0_68, %c0_69] : memref<1x128xf32, #tpu.memory_space<vmem>>, vector<1x128xf32>
    %186 = vector.broadcast %185 : vector<1x128xf32> to vector<8x128xf32>
    %187 = arith.addf %184, %186 : vector<8x128xf32>
    %c0_70 = arith.constant 0 : index
    %c0_71 = arith.constant 0 : index
    %188 = vector.load %arg6[%c0_70, %c0_71] : memref<8x128xf32, #tpu.memory_space<vmem>>, vector<8x128xf32>
    tpu.vector_store %arg6[%c0_70, %c0_71], %187 {strides = array<i32>} : memref<8x128xf32, #tpu.memory_space<vmem>>, vector<8x128xf32>,
    return
  }
}

</mosaic_0001>

<llo_original>
// kernel: recurrent_model_forward.1
$region0: #{recurrent_model_forward.1}
  #allocation0 [shape = 'u32[]', space=smem, size = 0x4, offset = 0x4, fixed_abs, tag = 'smem constant byte address 0x4 - core index']
  #allocation1 [shape = 'u32[144,128]{1,0:T(1,128)}', space=vmem, size = 0x12000, scoped, tag = 'internal scratch']
  #allocation2 [shape = 'f32[64,128]{1,0:T(8,128)}', space=vmem, size = 0x8000, scoped, tag = 'scratch operand']
  %s0 = inlined_call_operand.vmem [shape: f32[64,64], index: 0, kind: input, shape index: {}]
  %s1 = inlined_call_operand.vmem [shape: f32[64,128], index: 1, kind: input, shape index: {}]
  %s2 = inlined_call_operand.vmem [shape: f32[128,128], index: 2, kind: input, shape index: {}]
  %s3 = inlined_call_operand.vmem [shape: f32[1,128], index: 3, kind: input, shape index: {}]
  %s4 = inlined_call_operand.vmem [shape: f32[128,128], index: 4, kind: input, shape index: {}]
  %s5 = inlined_call_operand.vmem [shape: f32[1,128], index: 5, kind: input, shape index: {}]
  %s6 = inlined_call_operand.vmem [shape: f32[8,128], index: 6, kind: output, shape index: {}]
  %s7 = sld [smem:[#allocation0]]
  $region34: #{recurrent_model_forward.1} parent=0
    _
  %s9 = ssub.s32 1, %s7
  %s10 = scalar_select 0, %s9, %s7
  // Predicated region
  $region2: #{recurrent_model_forward.1} parent=0 // pred_check
    _
  $region3: #{recurrent_model_forward.1} parent=0 // pred_check_branch
    %12 = sbr.rel (0) target = $region5
  $region4: #{recurrent_model_forward.1} parent=0 // pred_region
    _
  $region5: #{recurrent_model_forward.1} parent=0 // pred_fallthru
    _
  // Predicated region
  $region6: #{recurrent_model_forward.1} parent=0 // pred_check
    _
  $region7: #{recurrent_model_forward.1} parent=0 // pred_check_branch
    %14 = sbr.rel (0) target = $region9
  $region8: #{recurrent_model_forward.1} parent=0 // pred_region
    _
  $region9: #{recurrent_model_forward.1} parent=0 // pred_fallthru
    _
  // Predicated region
  $region10: #{recurrent_model_forward.1} parent=0 // pred_check
    _
  $region11: #{recurrent_model_forward.1} parent=0 // pred_check_branch
    %16 = sbr.rel (0) target = $region13
  $region12: #{recurrent_model_forward.1} parent=0 // pred_region
    _
  $region13: #{recurrent_model_forward.1} parent=0 // pred_fallthru
    _
  // Predicated region
  $region14: #{recurrent_model_forward.1} parent=0 // pred_check
    _
  $region15: #{recurrent_model_forward.1} parent=0 // pred_check_branch
    %18 = sbr.rel (0) target = $region17
  $region16: #{recurrent_model_forward.1} parent=0 // pred_region
    _
  $region17: #{recurrent_model_forward.1} parent=0 // pred_fallthru
    _
  // Predicated region
  $region18: #{recurrent_model_forward.1} parent=0 // pred_check
    _
  $region19: #{recurrent_model_forward.1} parent=0 // pred_check_branch
    %20 = sbr.rel (0) target = $region21
  $region20: #{recurrent_model_forward.1} parent=0 // pred_region
    _
  $region21: #{recurrent_model_forward.1} parent=0 // pred_fallthru
    _
  // Predicated region
  $region22: #{recurrent_model_forward.1} parent=0 // pred_check
    _
  $region23: #{recurrent_model_forward.1} parent=0 // pred_check_branch
    %22 = sbr.rel (0) target = $region25
  $region24: #{recurrent_model_forward.1} parent=0 // pred_region
    _
  $region25: #{recurrent_model_forward.1} parent=0 // pred_fallthru
    _
  %v23 = vld [vmem:[%s0] sm:$0xff]
  %v24 = vld [vmem:[%s0 + $0x8] sm:$0xff]
  %v25 = vld [vmem:[%s0 + $0x10] sm:$0xff]
  %v26 = vld [vmem:[%s0 + $0x18] sm:$0xff]
  %v27 = vld [vmem:[%s0 + $0x20] sm:$0xff]
  %v28 = vld [vmem:[%s0 + $0x28] sm:$0xff]
  %v29 = vld [vmem:[%s0 + $0x30] sm:$0xff]
  %v30 = vld [vmem:[%s0 + $0x38] sm:$0xff]
  %v31 = vld [vmem:[%s1] sm:$0xff]
  %v32 = vld [vmem:[%s1 + $0x8] sm:$0xff]
  %v33 = vld [vmem:[%s1 + $0x10] sm:$0xff]
  %v34 = vld [vmem:[%s1 + $0x18] sm:$0xff]
  %v35 = vld [vmem:[%s1 + $0x20] sm:$0xff]
  %v36 = vld [vmem:[%s1 + $0x28] sm:$0xff]
  %v37 = vld [vmem:[%s1 + $0x30] sm:$0xff]
  %v38 = vld [vmem:[%s1 + $0x38] sm:$0xff]
  %v39 = vld [vmem:[%s3] sm:$0x1]
  %v41 = vlaneseq
  %v42 = vshrl.u32 %v41, 7
  %v43 = vsub.s32 0, %v42
  %v44 = vrot.slane %v39, %v43
  %vm46 = vcmask 523264
  %v48 = vsel %vm46, %v23, 0
  %v51 = vsel %vm46, %v24, 0
  %v54 = vsel %vm46, %v25, 0
  %v57 = vsel %vm46, %v26, 0
  %v60 = vsel %vm46, %v27, 0
  %v63 = vsel %vm46, %v28, 0
  %v66 = vsel %vm46, %v29, 0
  %v69 = vsel %vm46, %v30, 0
  %71 = vmatprep.subr.mxu0 0.0
  %72 = vmatpush1.msra.mxu0 0.0
  %73 = vmatprep.subr.mxu0 0.0
  %74 = vmatpush1.msra.mxu0 0.0
  %75 = vmatprep.subr.mxu0 0.0
  %76 = vmatpush1.msra.mxu0 0.0
  %77 = vmatprep.subr.mxu0 0.0
  %78 = vmatpush1.msra.mxu0 0.0
  %79 = vmatprep.subr.mxu0 0.0
  %80 = vmatpush1.msra.mxu0 0.0
  %81 = vmatprep.subr.mxu0 0.0
  %82 = vmatpush1.msra.mxu0 0.0
  %83 = vmatprep.subr.mxu0 0.0
  %84 = vmatpush1.msra.mxu0 0.0
  %85 = vmatprep.subr.mxu0 0.0
  %86 = vmatpush1.msra.mxu0 0.0
  %87 = vmatprep.subr.mxu0 0.0
  %88 = vmatpush1.msra.mxu0 %v38
  %89 = vmatprep.subr.mxu0 0.0
  %90 = vmatpush1.msra.mxu0 %v37
  %91 = vmatprep.subr.mxu0 0.0
  %92 = vmatpush1.msra.mxu0 %v36
  %93 = vmatprep.subr.mxu0 0.0
  %94 = vmatpush1.msra.mxu0 %v35
  %95 = vmatprep.subr.mxu0 0.0
  %96 = vmatpush1.msra.mxu0 %v34
  %97 = vmatprep.subr.mxu0 0.0
  %98 = vmatpush1.msra.mxu0 %v33
  %99 = vmatprep.subr.mxu0 0.0
  %100 = vmatpush1.msra.mxu0 %v32
  %101 = vmatprep.subr.mxu0 0.0
  %102 = vmatpush1.msra.mxu0 %v31
  %103 = vmatprep.subr.mxu0 0.0
  %104 = vmatpush2.msra.mxu0 0.0
  %105 = vmatprep.subr.mxu0 0.0
  %106 = vmatpush2.msra.mxu0 0.0
  %107 = vmatprep.subr.mxu0 0.0
  %108 = vmatpush2.msra.mxu0 0.0
  %109 = vmatprep.subr.mxu0 0.0
  %110 = vmatpush2.msra.mxu0 0.0
  %111 = vmatprep.subr.mxu0 0.0
  %112 = vmatpush2.msra.mxu0 0.0
  %113 = vmatprep.subr.mxu0 0.0
  %114 = vmatpush2.msra.mxu0 0.0
  %115 = vmatprep.subr.mxu0 0.0
  %116 = vmatpush2.msra.mxu0 0.0
  %117 = vmatprep.subr.mxu0 0.0
  %118 = vmatpush2.msra.mxu0 0.0
  %119 = vmatprep.subr.mxu0 0.0
  %120 = vmatpush2.msra.mxu0 0.0
  %121 = vmatprep.subr.mxu0 0.0
  %122 = vmatpush2.msra.mxu0 0.0
  %123 = vmatprep.subr.mxu0 0.0
  %124 = vmatpush2.msra.mxu0 0.0
  %125 = vmatprep.subr.mxu0 0.0
  %126 = vmatpush2.msra.mxu0 0.0
  %127 = vmatprep.subr.mxu0 0.0
  %128 = vmatpush2.msra.mxu0 0.0
  %129 = vmatprep.subr.mxu0 0.0
  %130 = vmatpush2.msra.mxu0 0.0
  %131 = vmatprep.subr.mxu0 0.0
  %132 = vmatpush2.msra.mxu0 0.0
  %133 = vmatprep.subr.mxu0 0.0
  %134 = vmatpush2.msra.mxu0 0.0
  %135 = vmatprep.mubr.f32.mxu0 0.0
  %136 = vmatmul.mubr.f32.gmra.mxu0 %v48
  %v137 = vpop.f32.mrf.mxu0
  %v138 = vadd.f32 %v44, %v137
  %v139 = vpop.f32.mrf.mxu0
  %140 = vmatprep.mubr.f32.mxu0 0.0
  %141 = vmatmul.mubr.f32.gmra.mxu0 %v51
  %v142 = vpop.f32.mrf.mxu0
  %v143 = vadd.f32 %v44, %v142
  %v144 = vpop.f32.mrf.mxu0
  %145 = vmatprep.mubr.f32.mxu0 0.0
  %146 = vmatmul.mubr.f32.gmra.mxu0 %v54
  %v147 = vpop.f32.mrf.mxu0
  %v148 = vadd.f32 %v44, %v147
  %v149 = vpop.f32.mrf.mxu0
  %150 = vmatprep.mubr.f32.mxu0 0.0
  %151 = vmatmul.mubr.f32.gmra.mxu0 %v57
  %v152 = vpop.f32.mrf.mxu0
  %v153 = vadd.f32 %v44, %v152
  %v154 = vpop.f32.mrf.mxu0
  %155 = vmatprep.mubr.f32.mxu0 0.0
  %156 = vmatmul.mubr.f32.gmra.mxu0 %v60
  %v157 = vpop.f32.mrf.mxu0
  %v158 = vadd.f32 %v44, %v157
  %v159 = vpop.f32.mrf.mxu0
  %160 = vmatprep.mubr.f32.mxu0 0.0
  %161 = vmatmul.mubr.f32.gmra.mxu0 %v63
  %v162 = vpop.f32.mrf.mxu0
  %v163 = vadd.f32 %v44, %v162
  %v164 = vpop.f32.mrf.mxu0
  %165 = vmatprep.mubr.f32.mxu0 0.0
  %166 = vmatmul.mubr.f32.gmra.mxu0 %v66
  %v167 = vpop.f32.mrf.mxu0
  %v168 = vadd.f32 %v44, %v167
  %v169 = vpop.f32.mrf.mxu0
  %170 = vmatprep.mubr.f32.mxu0 0.0
  %171 = vmatmul.mubr.f32.gmra.mxu0 %v69
  %v172 = vpop.f32.mrf.mxu0
  %v173 = vadd.f32 %v44, %v172
  %v174 = vpop.f32.mrf.mxu0
  %175 = vdwg.mxu0
  %176 = vst [vmem:[#allocation2] sm:$0xff] %v138
  %177 = vst [vmem:[#allocation2 + $0x8] sm:$0xff] %v143
  %178 = vst [vmem:[#allocation2 + $0x10] sm:$0xff] %v148
  %179 = vst [vmem:[#allocation2 + $0x18] sm:$0xff] %v153
  %180 = vst [vmem:[#allocation2 + $0x20] sm:$0xff] %v158
  %181 = vst [vmem:[#allocation2 + $0x28] sm:$0xff] %v163
  %182 = vst [vmem:[#allocation2 + $0x30] sm:$0xff] %v168
  %183 = vst [vmem:[#allocation2 + $0x38] sm:$0xff] %v173
  %v184 = vld [vmem:[%s2] sm:$0xff]
  %v185 = vld [vmem:[%s2 + $0x8] sm:$0xff]
  %v186 = vld [vmem:[%s2 + $0x10] sm:$0xff]
  %v187 = vld [vmem:[%s2 + $0x18] sm:$0xff]
  %v188 = vld [vmem:[%s2 + $0x20] sm:$0xff]
  %v189 = vld [vmem:[%s2 + $0x28] sm:$0xff]
  %v190 = vld [vmem:[%s2 + $0x30] sm:$0xff]
  %v191 = vld [vmem:[%s2 + $0x38] sm:$0xff]
  %v192 = vld [vmem:[%s2 + $0x40] sm:$0xff]
  %v193 = vld [vmem:[%s2 + $0x48] sm:$0xff]
  %v194 = vld [vmem:[%s2 + $0x50] sm:$0xff]
  %v195 = vld [vmem:[%s2 + $0x58] sm:$0xff]
  %v196 = vld [vmem:[%s2 + $0x60] sm:$0xff]
  %v197 = vld [vmem:[%s2 + $0x68] sm:$0xff]
  %v198 = vld [vmem:[%s2 + $0x70] sm:$0xff]
  %v199 = vld [vmem:[%s2 + $0x78] sm:$0xff]
  %v200 = vlaneseq
  %v201 = vand.u32 %v200, 127
  %vm202 = vcmp.ge.s32.totalorder %v201, 64
  %vm203 = vcmp.lt.s32.totalorder %v201, 96
  %vm204 = vmand %vm202, %vm203
  %v205 = vld [vmem:[#allocation2] sm:$0xff]
  %206 = vmatprep.subr.mxu0 0.0
  %207 = vmatpush1.msra.mxu0 %v199
  %208 = vmatprep.subr.mxu0 0.0
  %209 = vmatpush1.msra.mxu0 %v198
  %210 = vmatprep.subr.mxu0 0.0
  %211 = vmatpush1.msra.mxu0 %v197
  %212 = vmatprep.subr.mxu0 0.0
  %213 = vmatpush1.msra.mxu0 %v196
  %214 = vmatprep.subr.mxu0 0.0
  %215 = vmatpush1.msra.mxu0 %v195
  %216 = vmatprep.subr.mxu0 0.0
  %217 = vmatpush1.msra.mxu0 %v194
  %218 = vmatprep.subr.mxu0 0.0
  %219 = vmatpush1.msra.mxu0 %v193
  %220 = vmatprep.subr.mxu0 0.0
  %221 = vmatpush1.msra.mxu0 %v192
  %222 = vmatprep.subr.mxu0 0.0
  %223 = vmatpush1.msra.mxu0 %v191
  %224 = vmatprep.subr.mxu0 0.0
  %225 = vmatpush1.msra.mxu0 %v190
  %226 = vmatprep.subr.mxu0 0.0
  %227 = vmatpush1.msra.mxu0 %v189
  %228 = vmatprep.subr.mxu0 0.0
  %229 = vmatpush1.msra.mxu0 %v188
  %230 = vmatprep.subr.mxu0 0.0
  %231 = vmatpush1.msra.mxu0 %v187
  %232 = vmatprep.subr.mxu0 0.0
  %233 = vmatpush1.msra.mxu0 %v186
  %234 = vmatprep.subr.mxu0 0.0
  %235 = vmatpush1.msra.mxu0 %v185
  %236 = vmatprep.subr.mxu0 0.0
  %237 = vmatpush1.msra.mxu0 %v184
  %238 = vmatprep.subr.mxu0 0.0
  %239 = vmatpush2.msra.mxu0 0.0
  %240 = vmatprep.subr.mxu0 0.0
  %241 = vmatpush2.msra.mxu0 0.0
  %242 = vmatprep.subr.mxu0 0.0
  %243 = vmatpush2.msra.mxu0 0.0
  %244 = vmatprep.subr.mxu0 0.0
  %245 = vmatpush2.msra.mxu0 0.0
  %246 = vmatprep.subr.mxu0 0.0
  %247 = vmatpush2.msra.mxu0 0.0
  %248 = vmatprep.subr.mxu0 0.0
  %249 = vmatpush2.msra.mxu0 0.0
  %250 = vmatprep.subr.mxu0 0.0
  %251 = vmatpush2.msra.mxu0 0.0
  %252 = vmatprep.subr.mxu0 0.0
  %253 = vmatpush2.msra.mxu0 0.0
  %254 = vmatprep.subr.mxu0 0.0
  %255 = vmatpush2.msra.mxu0 0.0
  %256 = vmatprep.subr.mxu0 0.0
  %257 = vmatpush2.msra.mxu0 0.0
  %258 = vmatprep.subr.mxu0 0.0
  %259 = vmatpush2.msra.mxu0 0.0
  %260 = vmatprep.subr.mxu0 0.0
  %261 = vmatpush2.msra.mxu0 0.0
  %262 = vmatprep.subr.mxu0 0.0
  %263 = vmatpush2.msra.mxu0 0.0
  %264 = vmatprep.subr.mxu0 0.0
  %265 = vmatpush2.msra.mxu0 0.0
  %266 = vmatprep.subr.mxu0 0.0
  %267 = vmatpush2.msra.mxu0 0.0
  %268 = vmatprep.subr.mxu0 0.0
  %269 = vmatpush2.msra.mxu0 0.0
  %270 = vmatprep.mubr.f32.mxu0 0.0
  %271 = vmatmul.mubr.f32.gmra.mxu0 0.0
  %v272 = vpop.f32.mrf.mxu0
  %v273 = vadd.f32 0.0, %v272
  %v274 = vpop.f32.mrf.mxu0
  %275 = vdwg.mxu0
  %v276 = vadd.f32 %v205, %v273
  %v277 = vtanh.pop %v276
  %v278 = vxor.u32 %v276, 2147483648
  %v279 = vmul.f32 %v278, 1.442695
  %v280 = vpow.pop %v279
  %v281 = vadd.f32 %v280, 1.0
  %v282 = vrcp.pop %v281
  %v283 = vmul.f32 1.0, %v282
  %v284 = vsel %vm204, %v277, %v283
  %285 = vrot.lane.b32.xlu0 %v284, 96
  %v286 = vpop.permute.xlu0 %285
  %287 = vrot.lane.b32.xlu0 %v284, 64
  %v288 = vpop.permute.xlu0 %287
  %289 = vrot.lane.b32.xlu0 %v284, 32
  %v290 = vpop.permute.xlu0 %289
  %v291 = vmul.f32 %v286, 0.0
  %v292 = vmul.f32 %v284, %v288
  %v293 = vadd.f32 %v291, %v292
  %v294 = vtanh.pop %v293
  %v295 = vmul.f32 %v290, %v294
  %s296 = scalar_lea.vmem [#allocation2], 8
  %v297 = vld [vmem:[%s296] sm:$0xff]
  %298 = vmatprep.subr.mxu0 0.0
  %299 = vmatpush1.msra.mxu0 %v199
  %300 = vmatprep.subr.mxu0 0.0
  %301 = vmatpush1.msra.mxu0 %v198
  %302 = vmatprep.subr.mxu0 0.0
  %303 = vmatpush1.msra.mxu0 %v197
  %304 = vmatprep.subr.mxu0 0.0
  %305 = vmatpush1.msra.mxu0 %v196
  %306 = vmatprep.subr.mxu0 0.0
  %307 = vmatpush1.msra.mxu0 %v195
  %308 = vmatprep.subr.mxu0 0.0
  %309 = vmatpush1.msra.mxu0 %v194
  %310 = vmatprep.subr.mxu0 0.0
  %311 = vmatpush1.msra.mxu0 %v193
  %312 = vmatprep.subr.mxu0 0.0
  %313 = vmatpush1.msra.mxu0 %v192
  %314 = vmatprep.subr.mxu0 0.0
  %315 = vmatpush1.msra.mxu0 %v191
  %316 = vmatprep.subr.mxu0 0.0
  %317 = vmatpush1.msra.mxu0 %v190
  %318 = vmatprep.subr.mxu0 0.0
  %319 = vmatpush1.msra.mxu0 %v189
  %320 = vmatprep.subr.mxu0 0.0
  %321 = vmatpush1.msra.mxu0 %v188
  %322 = vmatprep.subr.mxu0 0.0
  %323 = vmatpush1.msra.mxu0 %v187
  %324 = vmatprep.subr.mxu0 0.0
  %325 = vmatpush1.msra.mxu0 %v186
  %326 = vmatprep.subr.mxu0 0.0
  %327 = vmatpush1.msra.mxu0 %v185
  %328 = vmatprep.subr.mxu0 0.0
  %329 = vmatpush1.msra.mxu0 %v184
  %330 = vmatprep.subr.mxu0 0.0
  %331 = vmatpush2.msra.mxu0 0.0
  %332 = vmatprep.subr.mxu0 0.0
  %333 = vmatpush2.msra.mxu0 0.0
  %334 = vmatprep.subr.mxu0 0.0
  %335 = vmatpush2.msra.mxu0 0.0
  %336 = vmatprep.subr.mxu0 0.0
  %337 = vmatpush2.msra.mxu0 0.0
  %338 = vmatprep.subr.mxu0 0.0
  %339 = vmatpush2.msra.mxu0 0.0
  %340 = vmatprep.subr.mxu0 0.0
  %341 = vmatpush2.msra.mxu0 0.0
  %342 = vmatprep.subr.mxu0 0.0
  %343 = vmatpush2.msra.mxu0 0.0
  %344 = vmatprep.subr.mxu0 0.0
  %345 = vmatpush2.msra.mxu0 0.0
  %346 = vmatprep.subr.mxu0 0.0
  %347 = vmatpush2.msra.mxu0 0.0
  %348 = vmatprep.subr.mxu0 0.0
  %349 = vmatpush2.msra.mxu0 0.0
  %350 = vmatprep.subr.mxu0 0.0
  %351 = vmatpush2.msra.mxu0 0.0
  %352 = vmatprep.subr.mxu0 0.0
  %353 = vmatpush2.msra.mxu0 0.0
  %354 = vmatprep.subr.mxu0 0.0
  %355 = vmatpush2.msra.mxu0 0.0
  %356 = vmatprep.subr.mxu0 0.0
  %357 = vmatpush2.msra.mxu0 0.0
  %358 = vmatprep.subr.mxu0 0.0
  %359 = vmatpush2.msra.mxu0 0.0
  %360 = vmatprep.subr.mxu0 0.0
  %361 = vmatpush2.msra.mxu0 0.0
  %362 = vmatprep.mubr.f32.mxu0 0.0
  %363 = vmatmul.mubr.f32.gmra.mxu0 %v295
  %v364 = vpop.f32.mrf.mxu0
  %v365 = vadd.f32 0.0, %v364
  %v366 = vpop.f32.mrf.mxu0
  %367 = vdwg.mxu0
  %v368 = vadd.f32 %v297, %v365
  %v369 = vtanh.pop %v368
  %v370 = vxor.u32 %v368, 2147483648
  %v371 = vmul.f32 %v370, 1.442695
  %v372 = vpow.pop %v371
  %v373 = vadd.f32 %v372, 1.0
  %v374 = vrcp.pop %v373
  %v375 = vmul.f32 1.0, %v374
  %v376 = vsel %vm204, %v369, %v375
  %377 = vrot.lane.b32.xlu0 %v376, 96
  %v378 = vpop.permute.xlu0 %377
  %379 = vrot.lane.b32.xlu0 %v376, 64
  %v380 = vpop.permute.xlu0 %379
  %381 = vrot.lane.b32.xlu0 %v376, 32
  %v382 = vpop.permute.xlu0 %381
  %v383 = vmul.f32 %v378, %v293
  %v384 = vmul.f32 %v376, %v380
  %v385 = vadd.f32 %v383, %v384
  %v386 = vtanh.pop %v385
  %v387 = vmul.f32 %v382, %v386
  %s388 = scalar_lea.vmem [#allocation2], 16
  %v389 = vld [vmem:[%s388] sm:$0xff]
  %390 = vmatprep.subr.mxu0 0.0
  %391 = vmatpush1.msra.mxu0 %v199
  %392 = vmatprep.subr.mxu0 0.0
  %393 = vmatpush1.msra.mxu0 %v198
  %394 = vmatprep.subr.mxu0 0.0
  %395 = vmatpush1.msra.mxu0 %v197
  %396 = vmatprep.subr.mxu0 0.0
  %397 = vmatpush1.msra.mxu0 %v196
  %398 = vmatprep.subr.mxu0 0.0
  %399 = vmatpush1.msra.mxu0 %v195
  %400 = vmatprep.subr.mxu0 0.0
  %401 = vmatpush1.msra.mxu0 %v194
  %402 = vmatprep.subr.mxu0 0.0
  %403 = vmatpush1.msra.mxu0 %v193
  %404 = vmatprep.subr.mxu0 0.0
  %405 = vmatpush1.msra.mxu0 %v192
  %406 = vmatprep.subr.mxu0 0.0
  %407 = vmatpush1.msra.mxu0 %v191
  %408 = vmatprep.subr.mxu0 0.0
  %409 = vmatpush1.msra.mxu0 %v190
  %410 = vmatprep.subr.mxu0 0.0
  %411 = vmatpush1.msra.mxu0 %v189
  %412 = vmatprep.subr.mxu0 0.0
  %413 = vmatpush1.msra.mxu0 %v188
  %414 = vmatprep.subr.mxu0 0.0
  %415 = vmatpush1.msra.mxu0 %v187
  %416 = vmatprep.subr.mxu0 0.0
  %417 = vmatpush1.msra.mxu0 %v186
  %418 = vmatprep.subr.mxu0 0.0
  %419 = vmatpush1.msra.mxu0 %v185
  %420 = vmatprep.subr.mxu0 0.0
  %421 = vmatpush1.msra.mxu0 %v184
  %422 = vmatprep.subr.mxu0 0.0
  %423 = vmatpush2.msra.mxu0 0.0
  %424 = vmatprep.subr.mxu0 0.0
  %425 = vmatpush2.msra.mxu0 0.0
  %426 = vmatprep.subr.mxu0 0.0
  %427 = vmatpush2.msra.mxu0 0.0
  %428 = vmatprep.subr.mxu0 0.0
  %429 = vmatpush2.msra.mxu0 0.0
  %430 = vmatprep.subr.mxu0 0.0
  %431 = vmatpush2.msra.mxu0 0.0
  %432 = vmatprep.subr.mxu0 0.0
  %433 = vmatpush2.msra.mxu0 0.0
  %434 = vmatprep.subr.mxu0 0.0
  %435 = vmatpush2.msra.mxu0 0.0
  %436 = vmatprep.subr.mxu0 0.0
  %437 = vmatpush2.msra.mxu0 0.0
  %438 = vmatprep.subr.mxu0 0.0
  %439 = vmatpush2.msra.mxu0 0.0
  %440 = vmatprep.subr.mxu0 0.0
  %441 = vmatpush2.msra.mxu0 0.0
  %442 = vmatprep.subr.mxu0 0.0
  %443 = vmatpush2.msra.mxu0 0.0
  %444 = vmatprep.subr.mxu0 0.0
  %445 = vmatpush2.msra.mxu0 0.0
  %446 = vmatprep.subr.mxu0 0.0
  %447 = vmatpush2.msra.mxu0 0.0
  %448 = vmatprep.subr.mxu0 0.0
  %449 = vmatpush2.msra.mxu0 0.0
  %450 = vmatprep.subr.mxu0 0.0
  %451 = vmatpush2.msra.mxu0 0.0
  %452 = vmatprep.subr.mxu0 0.0
  %453 = vmatpush2.msra.mxu0 0.0
  %454 = vmatprep.mubr.f32.mxu0 0.0
  %455 = vmatmul.mubr.f32.gmra.mxu0 %v387
  %v456 = vpop.f32.mrf.mxu0
  %v457 = vadd.f32 0.0, %v456
  %v458 = vpop.f32.mrf.mxu0
  %459 = vdwg.mxu0
  %v460 = vadd.f32 %v389, %v457
  %v461 = vtanh.pop %v460
  %v462 = vxor.u32 %v460, 2147483648
  %v463 = vmul.f32 %v462, 1.442695
  %v464 = vpow.pop %v463
  %v465 = vadd.f32 %v464, 1.0
  %v466 = vrcp.pop %v465
  %v467 = vmul.f32 1.0, %v466
  %v468 = vsel %vm204, %v461, %v467
  %469 = vrot.lane.b32.xlu0 %v468, 96
  %v470 = vpop.permute.xlu0 %469
  %471 = vrot.lane.b32.xlu0 %v468, 64
  %v472 = vpop.permute.xlu0 %471
  %473 = vrot.lane.b32.xlu0 %v468, 32
  %v474 = vpop.permute.xlu0 %473
  %v475 = vmul.f32 %v470, %v385
  %v476 = vmul.f32 %v468, %v472
  %v477 = vadd.f32 %v475, %v476
  %v478 = vtanh.pop %v477
  %v479 = vmul.f32 %v474, %v478
  %s480 = scalar_lea.vmem [#allocation2], 24
  %v481 = vld [vmem:[%s480] sm:$0xff]
  %482 = vmatprep.subr.mxu0 0.0
  %483 = vmatpush1.msra.mxu0 %v199
  %484 = vmatprep.subr.mxu0 0.0
  %485 = vmatpush1.msra.mxu0 %v198
  %486 = vmatprep.subr.mxu0 0.0
  %487 = vmatpush1.msra.mxu0 %v197
  %488 = vmatprep.subr.mxu0 0.0
  %489 = vmatpush1.msra.mxu0 %v196
  %490 = vmatprep.subr.mxu0 0.0
  %491 = vmatpush1.msra.mxu0 %v195
  %492 = vmatprep.subr.mxu0 0.0
  %493 = vmatpush1.msra.mxu0 %v194
  %494 = vmatprep.subr.mxu0 0.0
  %495 = vmatpush1.msra.mxu0 %v193
  %496 = vmatprep.subr.mxu0 0.0
  %497 = vmatpush1.msra.mxu0 %v192
  %498 = vmatprep.subr.mxu0 0.0
  %499 = vmatpush1.msra.mxu0 %v191
  %500 = vmatprep.subr.mxu0 0.0
  %501 = vmatpush1.msra.mxu0 %v190
  %502 = vmatprep.subr.mxu0 0.0
  %503 = vmatpush1.msra.mxu0 %v189
  %504 = vmatprep.subr.mxu0 0.0
  %505 = vmatpush1.msra.mxu0 %v188
  %506 = vmatprep.subr.mxu0 0.0
  %507 = vmatpush1.msra.mxu0 %v187
  %508 = vmatprep.subr.mxu0 0.0
  %509 = vmatpush1.msra.mxu0 %v186
  %510 = vmatprep.subr.mxu0 0.0
  %511 = vmatpush1.msra.mxu0 %v185
  %512 = vmatprep.subr.mxu0 0.0
  %513 = vmatpush1.msra.mxu0 %v184
  %514 = vmatprep.subr.mxu0 0.0
  %515 = vmatpush2.msra.mxu0 0.0
  %516 = vmatprep.subr.mxu0 0.0
  %517 = vmatpush2.msra.mxu0 0.0
  %518 = vmatprep.subr.mxu0 0.0
  %519 = vmatpush2.msra.mxu0 0.0
  %520 = vmatprep.subr.mxu0 0.0
  %521 = vmatpush2.msra.mxu0 0.0
  %522 = vmatprep.subr.mxu0 0.0
  %523 = vmatpush2.msra.mxu0 0.0
  %524 = vmatprep.subr.mxu0 0.0
  %525 = vmatpush2.msra.mxu0 0.0
  %526 = vmatprep.subr.mxu0 0.0
  %527 = vmatpush2.msra.mxu0 0.0
  %528 = vmatprep.subr.mxu0 0.0
  %529 = vmatpush2.msra.mxu0 0.0
  %530 = vmatprep.subr.mxu0 0.0
  %531 = vmatpush2.msra.mxu0 0.0
  %532 = vmatprep.subr.mxu0 0.0
  %533 = vmatpush2.msra.mxu0 0.0
  %534 = vmatprep.subr.mxu0 0.0
  %535 = vmatpush2.msra.mxu0 0.0
  %536 = vmatprep.subr.mxu0 0.0
  %537 = vmatpush2.msra.mxu0 0.0
  %538 = vmatprep.subr.mxu0 0.0
  %539 = vmatpush2.msra.mxu0 0.0
  %540 = vmatprep.subr.mxu0 0.0
  %541 = vmatpush2.msra.mxu0 0.0
  %542 = vmatprep.subr.mxu0 0.0
  %543 = vmatpush2.msra.mxu0 0.0
  %544 = vmatprep.subr.mxu0 0.0
  %545 = vmatpush2.msra.mxu0 0.0
  %546 = vmatprep.mubr.f32.mxu0 0.0
  %547 = vmatmul.mubr.f32.gmra.mxu0 %v479
  %v548 = vpop.f32.mrf.mxu0
  %v549 = vadd.f32 0.0, %v548
  %v550 = vpop.f32.mrf.mxu0
  %551 = vdwg.mxu0
  %v552 = vadd.f32 %v481, %v549
  %v553 = vtanh.pop %v552
  %v554 = vxor.u32 %v552, 2147483648
  %v555 = vmul.f32 %v554, 1.442695
  %v556 = vpow.pop %v555
  %v557 = vadd.f32 %v556, 1.0
  %v558 = vrcp.pop %v557
  %v559 = vmul.f32 1.0, %v558
  %v560 = vsel %vm204, %v553, %v559
  %561 = vrot.lane.b32.xlu0 %v560, 96
  %v562 = vpop.permute.xlu0 %561
  %563 = vrot.lane.b32.xlu0 %v560, 64
  %v564 = vpop.permute.xlu0 %563
  %565 = vrot.lane.b32.xlu0 %v560, 32
  %v566 = vpop.permute.xlu0 %565
  %v567 = vmul.f32 %v562, %v477
  %v568 = vmul.f32 %v560, %v564
  %v569 = vadd.f32 %v567, %v568
  %v570 = vtanh.pop %v569
  %v571 = vmul.f32 %v566, %v570
  %s572 = scalar_lea.vmem [#allocation2], 32
  %v573 = vld [vmem:[%s572] sm:$0xff]
  %574 = vmatprep.subr.mxu0 0.0
  %575 = vmatpush1.msra.mxu0 %v199
  %576 = vmatprep.subr.mxu0 0.0
  %577 = vmatpush1.msra.mxu0 %v198
  %578 = vmatprep.subr.mxu0 0.0
  %579 = vmatpush1.msra.mxu0 %v197
  %580 = vmatprep.subr.mxu0 0.0
  %581 = vmatpush1.msra.mxu0 %v196
  %582 = vmatprep.subr.mxu0 0.0
  %583 = vmatpush1.msra.mxu0 %v195
  %584 = vmatprep.subr.mxu0 0.0
  %585 = vmatpush1.msra.mxu0 %v194
  %586 = vmatprep.subr.mxu0 0.0
  %587 = vmatpush1.msra.mxu0 %v193
  %588 = vmatprep.subr.mxu0 0.0
  %589 = vmatpush1.msra.mxu0 %v192
  %590 = vmatprep.subr.mxu0 0.0
  %591 = vmatpush1.msra.mxu0 %v191
  %592 = vmatprep.subr.mxu0 0.0
  %593 = vmatpush1.msra.mxu0 %v190
  %594 = vmatprep.subr.mxu0 0.0
  %595 = vmatpush1.msra.mxu0 %v189
  %596 = vmatprep.subr.mxu0 0.0
  %597 = vmatpush1.msra.mxu0 %v188
  %598 = vmatprep.subr.mxu0 0.0
  %599 = vmatpush1.msra.mxu0 %v187
  %600 = vmatprep.subr.mxu0 0.0
  %601 = vmatpush1.msra.mxu0 %v186
  %602 = vmatprep.subr.mxu0 0.0
  %603 = vmatpush1.msra.mxu0 %v185
  %604 = vmatprep.subr.mxu0 0.0
  %605 = vmatpush1.msra.mxu0 %v184
  %606 = vmatprep.subr.mxu0 0.0
  %607 = vmatpush2.msra.mxu0 0.0
  %608 = vmatprep.subr.mxu0 0.0
  %609 = vmatpush2.msra.mxu0 0.0
  %610 = vmatprep.subr.mxu0 0.0
  %611 = vmatpush2.msra.mxu0 0.0
  %612 = vmatprep.subr.mxu0 0.0
  %613 = vmatpush2.msra.mxu0 0.0
  %614 = vmatprep.subr.mxu0 0.0
  %615 = vmatpush2.msra.mxu0 0.0
  %616 = vmatprep.subr.mxu0 0.0
  %617 = vmatpush2.msra.mxu0 0.0
  %618 = vmatprep.subr.mxu0 0.0
  %619 = vmatpush2.msra.mxu0 0.0
  %620 = vmatprep.subr.mxu0 0.0
  %621 = vmatpush2.msra.mxu0 0.0
  %622 = vmatprep.subr.mxu0 0.0
  %623 = vmatpush2.msra.mxu0 0.0
  %624 = vmatprep.subr.mxu0 0.0
  %625 = vmatpush2.msra.mxu0 0.0
  %626 = vmatprep.subr.mxu0 0.0
  %627 = vmatpush2.msra.mxu0 0.0
  %628 = vmatprep.subr.mxu0 0.0
  %629 = vmatpush2.msra.mxu0 0.0
  %630 = vmatprep.subr.mxu0 0.0
  %631 = vmatpush2.msra.mxu0 0.0
  %632 = vmatprep.subr.mxu0 0.0
  %633 = vmatpush2.msra.mxu0 0.0
  %634 = vmatprep.subr.mxu0 0.0
  %635 = vmatpush2.msra.mxu0 0.0
  %636 = vmatprep.subr.mxu0 0.0
  %637 = vmatpush2.msra.mxu0 0.0
  %638 = vmatprep.mubr.f32.mxu0 0.0
  %639 = vmatmul.mubr.f32.gmra.mxu0 %v571
  %v640 = vpop.f32.mrf.mxu0
  %v641 = vadd.f32 0.0, %v640
  %v642 = vpop.f32.mrf.mxu0
  %643 = vdwg.mxu0
  %v644 = vadd.f32 %v573, %v641
  %v645 = vtanh.pop %v644
  %v646 = vxor.u32 %v644, 2147483648
  %v647 = vmul.f32 %v646, 1.442695
  %v648 = vpow.pop %v647
  %v649 = vadd.f32 %v648, 1.0
  %v650 = vrcp.pop %v649
  %v651 = vmul.f32 1.0, %v650
  %v652 = vsel %vm204, %v645, %v651
  %653 = vrot.lane.b32.xlu0 %v652, 96
  %v654 = vpop.permute.xlu0 %653
  %655 = vrot.lane.b32.xlu0 %v652, 64
  %v656 = vpop.permute.xlu0 %655
  %657 = vrot.lane.b32.xlu0 %v652, 32
  %v658 = vpop.permute.xlu0 %657
  %v659 = vmul.f32 %v654, %v569
  %v660 = vmul.f32 %v652, %v656
  %v661 = vadd.f32 %v659, %v660
  %v662 = vtanh.pop %v661
  %v663 = vmul.f32 %v658, %v662
  %s664 = scalar_lea.vmem [#allocation2], 40
  %v665 = vld [vmem:[%s664] sm:$0xff]
  %666 = vmatprep.subr.mxu0 0.0
  %667 = vmatpush1.msra.mxu0 %v199
  %668 = vmatprep.subr.mxu0 0.0
  %669 = vmatpush1.msra.mxu0 %v198
  %670 = vmatprep.subr.mxu0 0.0
  %671 = vmatpush1.msra.mxu0 %v197
  %672 = vmatprep.subr.mxu0 0.0
  %673 = vmatpush1.msra.mxu0 %v196
  %674 = vmatprep.subr.mxu0 0.0
  %675 = vmatpush1.msra.mxu0 %v195
  %676 = vmatprep.subr.mxu0 0.0
  %677 = vmatpush1.msra.mxu0 %v194
  %678 = vmatprep.subr.mxu0 0.0
  %679 = vmatpush1.msra.mxu0 %v193
  %680 = vmatprep.subr.mxu0 0.0
  %681 = vmatpush1.msra.mxu0 %v192
  %682 = vmatprep.subr.mxu0 0.0
  %683 = vmatpush1.msra.mxu0 %v191
  %684 = vmatprep.subr.mxu0 0.0
  %685 = vmatpush1.msra.mxu0 %v190
  %686 = vmatprep.subr.mxu0 0.0
  %687 = vmatpush1.msra.mxu0 %v189
  %688 = vmatprep.subr.mxu0 0.0
  %689 = vmatpush1.msra.mxu0 %v188
  %690 = vmatprep.subr.mxu0 0.0
  %691 = vmatpush1.msra.mxu0 %v187
  %692 = vmatprep.subr.mxu0 0.0
  %693 = vmatpush1.msra.mxu0 %v186
  %694 = vmatprep.subr.mxu0 0.0
  %695 = vmatpush1.msra.mxu0 %v185
  %696 = vmatprep.subr.mxu0 0.0
  %697 = vmatpush1.msra.mxu0 %v184
  %698 = vmatprep.subr.mxu0 0.0
  %699 = vmatpush2.msra.mxu0 0.0
  %700 = vmatprep.subr.mxu0 0.0
  %701 = vmatpush2.msra.mxu0 0.0
  %702 = vmatprep.subr.mxu0 0.0
  %703 = vmatpush2.msra.mxu0 0.0
  %704 = vmatprep.subr.mxu0 0.0
  %705 = vmatpush2.msra.mxu0 0.0
  %706 = vmatprep.subr.mxu0 0.0
  %707 = vmatpush2.msra.mxu0 0.0
  %708 = vmatprep.subr.mxu0 0.0
  %709 = vmatpush2.msra.mxu0 0.0
  %710 = vmatprep.subr.mxu0 0.0
  %711 = vmatpush2.msra.mxu0 0.0
  %712 = vmatprep.subr.mxu0 0.0
  %713 = vmatpush2.msra.mxu0 0.0
  %714 = vmatprep.subr.mxu0 0.0
  %715 = vmatpush2.msra.mxu0 0.0
  %716 = vmatprep.subr.mxu0 0.0
  %717 = vmatpush2.msra.mxu0 0.0
  %718 = vmatprep.subr.mxu0 0.0
  %719 = vmatpush2.msra.mxu0 0.0
  %720 = vmatprep.subr.mxu0 0.0
  %721 = vmatpush2.msra.mxu0 0.0
  %722 = vmatprep.subr.mxu0 0.0
  %723 = vmatpush2.msra.mxu0 0.0
  %724 = vmatprep.subr.mxu0 0.0
  %725 = vmatpush2.msra.mxu0 0.0
  %726 = vmatprep.subr.mxu0 0.0
  %727 = vmatpush2.msra.mxu0 0.0
  %728 = vmatprep.subr.mxu0 0.0
  %729 = vmatpush2.msra.mxu0 0.0
  %730 = vmatprep.mubr.f32.mxu0 0.0
  %731 = vmatmul.mubr.f32.gmra.mxu0 %v663
  %v732 = vpop.f32.mrf.mxu0
  %v733 = vadd.f32 0.0, %v732
  %v734 = vpop.f32.mrf.mxu0
  %735 = vdwg.mxu0
  %v736 = vadd.f32 %v665, %v733
  %v737 = vtanh.pop %v736
  %v738 = vxor.u32 %v736, 2147483648
  %v739 = vmul.f32 %v738, 1.442695
  %v740 = vpow.pop %v739
  %v741 = vadd.f32 %v740, 1.0
  %v742 = vrcp.pop %v741
  %v743 = vmul.f32 1.0, %v742
  %v744 = vsel %vm204, %v737, %v743
  %745 = vrot.lane.b32.xlu0 %v744, 96
  %v746 = vpop.permute.xlu0 %745
  %747 = vrot.lane.b32.xlu0 %v744, 64
  %v748 = vpop.permute.xlu0 %747
  %749 = vrot.lane.b32.xlu0 %v744, 32
  %v750 = vpop.permute.xlu0 %749
  %v751 = vmul.f32 %v746, %v661
  %v752 = vmul.f32 %v744, %v748
  %v753 = vadd.f32 %v751, %v752
  %v754 = vtanh.pop %v753
  %v755 = vmul.f32 %v750, %v754
  %s756 = scalar_lea.vmem [#allocation2], 48
  %v757 = vld [vmem:[%s756] sm:$0xff]
  %758 = vmatprep.subr.mxu0 0.0
  %759 = vmatpush1.msra.mxu0 %v199
  %760 = vmatprep.subr.mxu0 0.0
  %761 = vmatpush1.msra.mxu0 %v198
  %762 = vmatprep.subr.mxu0 0.0
  %763 = vmatpush1.msra.mxu0 %v197
  %764 = vmatprep.subr.mxu0 0.0
  %765 = vmatpush1.msra.mxu0 %v196
  %766 = vmatprep.subr.mxu0 0.0
  %767 = vmatpush1.msra.mxu0 %v195
  %768 = vmatprep.subr.mxu0 0.0
  %769 = vmatpush1.msra.mxu0 %v194
  %770 = vmatprep.subr.mxu0 0.0
  %771 = vmatpush1.msra.mxu0 %v193
  %772 = vmatprep.subr.mxu0 0.0
  %773 = vmatpush1.msra.mxu0 %v192
  %774 = vmatprep.subr.mxu0 0.0
  %775 = vmatpush1.msra.mxu0 %v191
  %776 = vmatprep.subr.mxu0 0.0
  %777 = vmatpush1.msra.mxu0 %v190
  %778 = vmatprep.subr.mxu0 0.0
  %779 = vmatpush1.msra.mxu0 %v189
  %780 = vmatprep.subr.mxu0 0.0
  %781 = vmatpush1.msra.mxu0 %v188
  %782 = vmatprep.subr.mxu0 0.0
  %783 = vmatpush1.msra.mxu0 %v187
  %784 = vmatprep.subr.mxu0 0.0
  %785 = vmatpush1.msra.mxu0 %v186
  %786 = vmatprep.subr.mxu0 0.0
  %787 = vmatpush1.msra.mxu0 %v185
  %788 = vmatprep.subr.mxu0 0.0
  %789 = vmatpush1.msra.mxu0 %v184
  %790 = vmatprep.subr.mxu0 0.0
  %791 = vmatpush2.msra.mxu0 0.0
  %792 = vmatprep.subr.mxu0 0.0
  %793 = vmatpush2.msra.mxu0 0.0
  %794 = vmatprep.subr.mxu0 0.0
  %795 = vmatpush2.msra.mxu0 0.0
  %796 = vmatprep.subr.mxu0 0.0
  %797 = vmatpush2.msra.mxu0 0.0
  %798 = vmatprep.subr.mxu0 0.0
  %799 = vmatpush2.msra.mxu0 0.0
  %800 = vmatprep.subr.mxu0 0.0
  %801 = vmatpush2.msra.mxu0 0.0
  %802 = vmatprep.subr.mxu0 0.0
  %803 = vmatpush2.msra.mxu0 0.0
  %804 = vmatprep.subr.mxu0 0.0
  %805 = vmatpush2.msra.mxu0 0.0
  %806 = vmatprep.subr.mxu0 0.0
  %807 = vmatpush2.msra.mxu0 0.0
  %808 = vmatprep.subr.mxu0 0.0
  %809 = vmatpush2.msra.mxu0 0.0
  %810 = vmatprep.subr.mxu0 0.0
  %811 = vmatpush2.msra.mxu0 0.0
  %812 = vmatprep.subr.mxu0 0.0
  %813 = vmatpush2.msra.mxu0 0.0
  %814 = vmatprep.subr.mxu0 0.0
  %815 = vmatpush2.msra.mxu0 0.0
  %816 = vmatprep.subr.mxu0 0.0
  %817 = vmatpush2.msra.mxu0 0.0
  %818 = vmatprep.subr.mxu0 0.0
  %819 = vmatpush2.msra.mxu0 0.0
  %820 = vmatprep.subr.mxu0 0.0
  %821 = vmatpush2.msra.mxu0 0.0
  %822 = vmatprep.mubr.f32.mxu0 0.0
  %823 = vmatmul.mubr.f32.gmra.mxu0 %v755
  %v824 = vpop.f32.mrf.mxu0
  %v825 = vadd.f32 0.0, %v824
  %v826 = vpop.f32.mrf.mxu0
  %827 = vdwg.mxu0
  %v828 = vadd.f32 %v757, %v825
  %v829 = vtanh.pop %v828
  %v830 = vxor.u32 %v828, 2147483648
  %v831 = vmul.f32 %v830, 1.442695
  %v832 = vpow.pop %v831
  %v833 = vadd.f32 %v832, 1.0
  %v834 = vrcp.pop %v833
  %v835 = vmul.f32 1.0, %v834
  %v836 = vsel %vm204, %v829, %v835
  %837 = vrot.lane.b32.xlu0 %v836, 96
  %v838 = vpop.permute.xlu0 %837
  %839 = vrot.lane.b32.xlu0 %v836, 64
  %v840 = vpop.permute.xlu0 %839
  %841 = vrot.lane.b32.xlu0 %v836, 32
  %v842 = vpop.permute.xlu0 %841
  %v843 = vmul.f32 %v838, %v753
  %v844 = vmul.f32 %v836, %v840
  %v845 = vadd.f32 %v843, %v844
  %v846 = vtanh.pop %v845
  %v847 = vmul.f32 %v842, %v846
  %s848 = scalar_lea.vmem [#allocation2], 56
  %v849 = vld [vmem:[%s848] sm:$0xff]
  %850 = vmatprep.subr.mxu0 0.0
  %851 = vmatpush1.msra.mxu0 %v199
  %852 = vmatprep.subr.mxu0 0.0
  %853 = vmatpush1.msra.mxu0 %v198
  %854 = vmatprep.subr.mxu0 0.0
  %855 = vmatpush1.msra.mxu0 %v197
  %856 = vmatprep.subr.mxu0 0.0
  %857 = vmatpush1.msra.mxu0 %v196
  %858 = vmatprep.subr.mxu0 0.0
  %859 = vmatpush1.msra.mxu0 %v195
  %860 = vmatprep.subr.mxu0 0.0
  %861 = vmatpush1.msra.mxu0 %v194
  %862 = vmatprep.subr.mxu0 0.0
  %863 = vmatpush1.msra.mxu0 %v193
  %864 = vmatprep.subr.mxu0 0.0
  %865 = vmatpush1.msra.mxu0 %v192
  %866 = vmatprep.subr.mxu0 0.0
  %867 = vmatpush1.msra.mxu0 %v191
  %868 = vmatprep.subr.mxu0 0.0
  %869 = vmatpush1.msra.mxu0 %v190
  %870 = vmatprep.subr.mxu0 0.0
  %871 = vmatpush1.msra.mxu0 %v189
  %872 = vmatprep.subr.mxu0 0.0
  %873 = vmatpush1.msra.mxu0 %v188
  %874 = vmatprep.subr.mxu0 0.0
  %875 = vmatpush1.msra.mxu0 %v187
  %876 = vmatprep.subr.mxu0 0.0
  %877 = vmatpush1.msra.mxu0 %v186
  %878 = vmatprep.subr.mxu0 0.0
  %879 = vmatpush1.msra.mxu0 %v185
  %880 = vmatprep.subr.mxu0 0.0
  %881 = vmatpush1.msra.mxu0 %v184
  %882 = vmatprep.subr.mxu0 0.0
  %883 = vmatpush2.msra.mxu0 0.0
  %884 = vmatprep.subr.mxu0 0.0
  %885 = vmatpush2.msra.mxu0 0.0
  %886 = vmatprep.subr.mxu0 0.0
  %887 = vmatpush2.msra.mxu0 0.0
  %888 = vmatprep.subr.mxu0 0.0
  %889 = vmatpush2.msra.mxu0 0.0
  %890 = vmatprep.subr.mxu0 0.0
  %891 = vmatpush2.msra.mxu0 0.0
  %892 = vmatprep.subr.mxu0 0.0
  %893 = vmatpush2.msra.mxu0 0.0
  %894 = vmatprep.subr.mxu0 0.0
  %895 = vmatpush2.msra.mxu0 0.0
  %896 = vmatprep.subr.mxu0 0.0
  %897 = vmatpush2.msra.mxu0 0.0
  %898 = vmatprep.subr.mxu0 0.0
  %899 = vmatpush2.msra.mxu0 0.0
  %900 = vmatprep.subr.mxu0 0.0
  %901 = vmatpush2.msra.mxu0 0.0
  %902 = vmatprep.subr.mxu0 0.0
  %903 = vmatpush2.msra.mxu0 0.0
  %904 = vmatprep.subr.mxu0 0.0
  %905 = vmatpush2.msra.mxu0 0.0
  %906 = vmatprep.subr.mxu0 0.0
  %907 = vmatpush2.msra.mxu0 0.0
  %908 = vmatprep.subr.mxu0 0.0
  %909 = vmatpush2.msra.mxu0 0.0
  %910 = vmatprep.subr.mxu0 0.0
  %911 = vmatpush2.msra.mxu0 0.0
  %912 = vmatprep.subr.mxu0 0.0
  %913 = vmatpush2.msra.mxu0 0.0
  %914 = vmatprep.mubr.f32.mxu0 0.0
  %915 = vmatmul.mubr.f32.gmra.mxu0 %v847
  %v916 = vpop.f32.mrf.mxu0
  %v917 = vadd.f32 0.0, %v916
  %v918 = vpop.f32.mrf.mxu0
  %919 = vdwg.mxu0
  %v920 = vadd.f32 %v849, %v917
  %v921 = vtanh.pop %v920
  %v922 = vxor.u32 %v920, 2147483648
  %v923 = vmul.f32 %v922, 1.442695
  %v924 = vpow.pop %v923
  %v925 = vadd.f32 %v924, 1.0
  %v926 = vrcp.pop %v925
  %v927 = vmul.f32 1.0, %v926
  %v928 = vsel %vm204, %v921, %v927
  %929 = vrot.lane.b32.xlu0 %v928, 96
  %v930 = vpop.permute.xlu0 %929
  %931 = vrot.lane.b32.xlu0 %v928, 64
  %v932 = vpop.permute.xlu0 %931
  %933 = vrot.lane.b32.xlu0 %v928, 32
  %v934 = vpop.permute.xlu0 %933
  %v935 = vmul.f32 %v930, %v845
  %v936 = vmul.f32 %v928, %v932
  %v937 = vadd.f32 %v935, %v936
  %v938 = vtanh.pop %v937
  %v939 = vmul.f32 %v934, %v938
  %v940 = vld [vmem:[%s4] sm:$0xff]
  %v941 = vld [vmem:[%s4 + $0x8] sm:$0xff]
  %v942 = vld [vmem:[%s4 + $0x10] sm:$0xff]
  %v943 = vld [vmem:[%s4 + $0x18] sm:$0xff]
  %v944 = vld [vmem:[%s4 + $0x20] sm:$0xff]
  %v945 = vld [vmem:[%s4 + $0x28] sm:$0xff]
  %v946 = vld [vmem:[%s4 + $0x30] sm:$0xff]
  %v947 = vld [vmem:[%s4 + $0x38] sm:$0xff]
  %v948 = vld [vmem:[%s4 + $0x40] sm:$0xff]
  %v949 = vld [vmem:[%s4 + $0x48] sm:$0xff]
  %v950 = vld [vmem:[%s4 + $0x50] sm:$0xff]
  %v951 = vld [vmem:[%s4 + $0x58] sm:$0xff]
  %v952 = vld [vmem:[%s4 + $0x60] sm:$0xff]
  %v953 = vld [vmem:[%s4 + $0x68] sm:$0xff]
  %v954 = vld [vmem:[%s4 + $0x70] sm:$0xff]
  %v955 = vld [vmem:[%s4 + $0x78] sm:$0xff]
  %v956 = vld [vmem:[%s5] sm:$0x1]
  %v958 = vlaneseq
  %v959 = vshrl.u32 %v958, 7
  %v960 = vsub.s32 0, %v959
  %v961 = vrot.slane %v956, %v960
  %963 = vmatprep.subr.mxu0 0.0
  %964 = vmatpush1.msra.mxu0 %v955
  %965 = vmatprep.subr.mxu0 0.0
  %966 = vmatpush1.msra.mxu0 %v954
  %967 = vmatprep.subr.mxu0 0.0
  %968 = vmatpush1.msra.mxu0 %v953
  %969 = vmatprep.subr.mxu0 0.0
  %970 = vmatpush1.msra.mxu0 %v952
  %971 = vmatprep.subr.mxu0 0.0
  %972 = vmatpush1.msra.mxu0 %v951
  %973 = vmatprep.subr.mxu0 0.0
  %974 = vmatpush1.msra.mxu0 %v950
  %975 = vmatprep.subr.mxu0 0.0
  %976 = vmatpush1.msra.mxu0 %v949
  %977 = vmatprep.subr.mxu0 0.0
  %978 = vmatpush1.msra.mxu0 %v948
  %979 = vmatprep.subr.mxu0 0.0
  %980 = vmatpush1.msra.mxu0 %v947
  %981 = vmatprep.subr.mxu0 0.0
  %982 = vmatpush1.msra.mxu0 %v946
  %983 = vmatprep.subr.mxu0 0.0
  %984 = vmatpush1.msra.mxu0 %v945
  %985 = vmatprep.subr.mxu0 0.0
  %986 = vmatpush1.msra.mxu0 %v944
  %987 = vmatprep.subr.mxu0 0.0
  %988 = vmatpush1.msra.mxu0 %v943
  %989 = vmatprep.subr.mxu0 0.0
  %990 = vmatpush1.msra.mxu0 %v942
  %991 = vmatprep.subr.mxu0 0.0
  %992 = vmatpush1.msra.mxu0 %v941
  %993 = vmatprep.subr.mxu0 0.0
  %994 = vmatpush1.msra.mxu0 %v940
  %995 = vmatprep.subr.mxu0 0.0
  %996 = vmatpush2.msra.mxu0 0.0
  %997 = vmatprep.subr.mxu0 0.0
  %998 = vmatpush2.msra.mxu0 0.0
  %999 = vmatprep.subr.mxu0 0.0
  %1000 = vmatpush2.msra.mxu0 0.0
  %1001 = vmatprep.subr.mxu0 0.0
  %1002 = vmatpush2.msra.mxu0 0.0
  %1003 = vmatprep.subr.mxu0 0.0
  %1004 = vmatpush2.msra.mxu0 0.0
  %1005 = vmatprep.subr.mxu0 0.0
  %1006 = vmatpush2.msra.mxu0 0.0
  %1007 = vmatprep.subr.mxu0 0.0
  %1008 = vmatpush2.msra.mxu0 0.0
  %1009 = vmatprep.subr.mxu0 0.0
  %1010 = vmatpush2.msra.mxu0 0.0
  %1011 = vmatprep.subr.mxu0 0.0
  %1012 = vmatpush2.msra.mxu0 0.0
  %1013 = vmatprep.subr.mxu0 0.0
  %1014 = vmatpush2.msra.mxu0 0.0
  %1015 = vmatprep.subr.mxu0 0.0
  %1016 = vmatpush2.msra.mxu0 0.0
  %1017 = vmatprep.subr.mxu0 0.0
  %1018 = vmatpush2.msra.mxu0 0.0
  %1019 = vmatprep.subr.mxu0 0.0
  %1020 = vmatpush2.msra.mxu0 0.0
  %1021 = vmatprep.subr.mxu0 0.0
  %1022 = vmatpush2.msra.mxu0 0.0
  %1023 = vmatprep.subr.mxu0 0.0
  %1024 = vmatpush2.msra.mxu0 0.0
  %1025 = vmatprep.subr.mxu0 0.0
  %1026 = vmatpush2.msra.mxu0 0.0
  %1027 = vmatprep.mubr.f32.mxu0 0.0
  %1028 = vmatmul.mubr.f32.gmra.mxu0 %v939
  %v1029 = vpop.f32.mrf.mxu0
  %v1030 = vadd.f32 %v961, %v1029
  %v1031 = vpop.f32.mrf.mxu0
  %1032 = vdwg.mxu0
  %1033 = vst [vmem:[%s6] sm:$0xff] %v1030
  // Predicated region
  $region26: #{recurrent_model_forward.1} parent=0 // pred_check
    _
  $region27: #{recurrent_model_forward.1} parent=0 // pred_check_branch
    %1035 = sbr.rel (0) target = $region29
  $region28: #{recurrent_model_forward.1} parent=0 // pred_region
    _
  $region29: #{recurrent_model_forward.1} parent=0 // pred_fallthru
    _
  // Predicated region
  $region30: #{recurrent_model_forward.1} parent=0 // pred_check
    _
  $region31: #{recurrent_model_forward.1} parent=0 // pred_check_branch
    %1037 = sbr.rel (0) target = $region33
  $region32: #{recurrent_model_forward.1} parent=0 // pred_region
    _
  $region33: #{recurrent_model_forward.1} parent=0 // pred_fallthru
    _

</llo_original>
